<compile_context>
chip_gen: v5e
topology: v5e:2x2
jax: 0.10.0
libtpu: 0.0.40
codegen_flags: <defaults>
</compile_context>

<pallas_src>
import functools

import jax
import jax.numpy as jnp
from jax.experimental import pallas as pl
from jax.experimental.pallas import tpu as pltpu


def autopad(k, p=None):
    if p is None:
        p = k // 2 if isinstance(k, int) else [x // 2 for x in k]
    return p


def _round_up(x, m):
    return (x + m - 1) // m * m


def _conv_gemm_kernel(x_ref, w_ref, s_ref, b_ref, o_ref):
    # x_ref: (1, TM, CKp)  bf16  im2col rows for this M tile
    # w_ref: (CKp, TC2)    bf16  conv weights, tap-major, padded
    # s_ref: (1, TC2)      f32   BN scale (eval-mode, folded)
    # b_ref: (1, TC2)      f32   BN bias  (eval-mode, folded)
    # o_ref: (1, TM, TC2)  output dtype
    acc = jnp.dot(x_ref[0], w_ref[...], preferred_element_type=jnp.float32)
    y = acc * s_ref[...] + b_ref[...]          # BN epilogue in f32
    y = y * jax.nn.sigmoid(y)                  # SiLU (EUP)
    o_ref[0] = y.astype(o_ref.dtype)


def _device_params():
    """Generation-aware tiling budget / VMEM cap / v5e flag."""
    try:
        kind = jax.devices()[0].device_kind.lower()
    except Exception:
        kind = ""
    is_v5e = ("v5e" in kind) or ("v5 lite" in kind) or ("v5litepod" in kind)
    is_v7 = "v7" in kind
    if is_v7:                       # 64 MiB VMEM per TensorCore
        budget, cap = 14 * 2 ** 20, 48 * 2 ** 20
    else:                           # v5e / v6e: 128 MiB VMEM
        budget, cap = 32 * 2 ** 20, 100 * 2 ** 20
    return is_v5e, budget, cap


def _choose_tm(M, CKp, TC2, out_itemsize, budget):
    """Largest 128-aligned M tile whose double-buffered working set fits."""
    def fp(tm):
        return (2 * tm * CKp * 2            # x block (bf16), double buffered
                + 2 * CKp * TC2 * 2         # weight block (bf16), double buffered
                + 2 * tm * TC2 * out_itemsize   # out block, double buffered
                + tm * TC2 * 4)             # f32 epilogue intermediate
    tm = 128
    for cand in (4096, 2048, 1024, 512, 256, 128):
        if fp(cand) <= budget:
            tm = cand
            break
    return min(tm, _round_up(M, 128))


@functools.partial(jax.jit, static_argnames=("k", "s", "p"))
def conv_bn_silu(x_nchw, weight_oihw, gamma, beta, running_mean, running_var,
                 *, k=1, s=1, p=None, eps=1e-5):
    """Pallas equivalent of Conv.forward: SiLU(BN(Conv2d(x))), eval-mode BN."""
    p = autopad(k, p)
    N, C1, H, W = x_nchw.shape
    C2 = weight_oihw.shape[0]
    HO = (H + 2 * p - k) // s + 1
    WO = (W + 2 * p - k) // s + 1
    M = HO * WO
    CK = k * k * C1

    out_dtype = x_nchw.dtype
    o_isz = jnp.dtype(out_dtype).itemsize

    is_v5e, budget, vmem_cap = _device_params()
    CKp = _round_up(CK, 128)                     # lane-dense contraction depth
    C2p = _round_up(C2, 128)                     # lane-dense output channels
    if is_v5e:
        TC2 = 128                                # matches v5e 4x128^2 MXU
    else:
        TC2 = 256 if C2p % 256 == 0 else 128     # v6e/v7x 2x256^2 MXU
    CT = C2p // TC2

    TM = _choose_tm(M, CKp, TC2, o_isz, budget)
    MT = -(-M // TM)
    Mp = MT * TM

    # ---------------- wrapper glue (plain JAX, same jit) ----------------
    x_nhwc = jnp.transpose(x_nchw, (0, 2, 3, 1))                  # (N,H,W,C1)
    x_pad = jnp.pad(x_nhwc, ((0, 0), (p, p), (p, p), (0, 0)))     # (N,Hp,Wp,C1)

    # Full k*k im2col, stride folded in: (N, HO, WO, k*k*C1),
    # column index (kh*k + kw)*C1 + c -- matches the weight reshape below.
    cols = []
    for kh in range(k):
        for kw in range(k):
            cols.append(x_pad[:, kh:kh + s * (HO - 1) + 1:s,
                              kw:kw + s * (WO - 1) + 1:s, :])
    x2 = jnp.concatenate(cols, axis=-1) if len(cols) > 1 else cols[0]
    x2 = x2.reshape(N, M, CK)
    x3 = jnp.pad(x2, ((0, 0), (0, Mp - M), (0, CKp - CK))).astype(jnp.bfloat16)

    # Conv weights, tap-major (k*k*C1, C2) -> padded bf16 (CKp, C2p).
    wk = jnp.transpose(weight_oihw, (2, 3, 1, 0)).reshape(CK, C2)
    wk = jnp.pad(wk, ((0, CKp - CK), (0, C2p - C2))).astype(jnp.bfloat16)

    # Eval-mode BN folded to scale/bias, applied in the f32 epilogue.
    scale = gamma / jnp.sqrt(running_var + eps)                    # (C2,)
    bias = beta - running_mean * scale                              # (C2,)
    scale_p = jnp.pad(scale, (0, C2p - C2)).reshape(1, C2p).astype(jnp.float32)
    bias_p = jnp.pad(bias, (0, C2p - C2)).reshape(1, C2p).astype(jnp.float32)

    # VMEM request (double-buffered blocks + f32 intermediate), generation-capped.
    est = (2 * (TM * CKp * 2 + CKp * TC2 * 2 + TM * TC2 * o_isz + 2 * TC2 * 4)
           + TM * TC2 * 4)
    vmem_limit = int(min(vmem_cap, max(32 * 2 ** 20, 2 * est)))

    cost = pl.CostEstimate(
        flops=2 * N * M * C2 * CK,
        transcendentals=N * M * C2,
        bytes_accessed=int(CT * x3.size * 2 + N * wk.size * 2
                           + N * Mp * C2p * o_isz),
    )

    out_p = pl.pallas_call(
        _conv_gemm_kernel,
        out_shape=jax.ShapeDtypeStruct((N, Mp, C2p), out_dtype),
        grid=(N, CT, MT),            # M innermost: weight/scale/bias stay resident
        in_specs=[
            pl.BlockSpec((1, TM, CKp), lambda n, c, m: (n, m, 0)),
            pl.BlockSpec((CKp, TC2), lambda n, c, m: (0, c)),
            pl.BlockSpec((1, TC2), lambda n, c, m: (0, c)),
            pl.BlockSpec((1, TC2), lambda n, c, m: (0, c)),
        ],
        out_specs=pl.BlockSpec((1, TM, TC2), lambda n, c, m: (n, m, c)),
        compiler_params=pltpu.CompilerParams(
            dimension_semantics=("parallel", "parallel", "parallel"),
            vmem_limit_bytes=vmem_limit),
        cost_estimate=cost,
    )(x3, wk, scale_p, bias_p)

    # Strip padding, unflatten spatial dims, NHWC -> NCHW (PyTorch convention).
    out = out_p[:, :M, :C2].reshape(N, HO, WO, C2)
    return jnp.transpose(out, (0, 3, 1, 2))


def _reference(x_nchw, weight_oihw, gamma, beta, mean, var, *, k, s, p, eps=1e-5):
    p = autopad(k, p)
    y = jax.lax.conv_general_dilated(
        x_nchw.astype(jnp.float32), weight_oihw.astype(jnp.float32),
        window_strides=(s, s), padding=((p, p), (p, p)),
        dimension_numbers=("NCHW", "OIHW", "NCHW"))
    scale = gamma / jnp.sqrt(var + eps)
    bias = beta - mean * scale
    y = y * scale[None, :, None, None] + bias[None, :, None, None]
    return y * jax.nn.sigmoid(y)


if __name__ == "__main__":
    # Conv(c1=4, c2=8, k=3, s=1): conv weight (8, 4, 3, 3), BN over 8 channels.
    N, C1, H, W = 2, 4, 16, 16
    C2, K, S = 8, 3, 1

    key = jax.random.PRNGKey(0)
    kx, kw_, kg, kb, km, kv = jax.random.split(key, 6)

    x = jax.random.normal(kx, (N, C1, H, W), dtype=jnp.float32)
    weight = jax.random.normal(kw_, (C2, C1, K, K), dtype=jnp.float32) * 0.1
    gamma = 1.0 + 0.1 * jax.random.normal(kg, (C2,), dtype=jnp.float32)
    beta = 0.1 * jax.random.normal(kb, (C2,), dtype=jnp.float32)
    running_mean = 0.1 * jax.random.normal(km, (C2,), dtype=jnp.float32)
    running_var = jnp.abs(jax.random.normal(kv, (C2,), dtype=jnp.float32)) + 0.5

    out = conv_bn_silu(x, weight, gamma, beta, running_mean, running_var,
                       k=K, s=S, p=None)
    out = jax.block_until_ready(out)
    ref = _reference(x, weight, gamma, beta, running_mean, running_var,
                     k=K, s=S, p=None)
    assert out.shape == (N, C2, H, W), out.shape
    err = float(jnp.max(jnp.abs(out - ref)))
    assert err < 2e-2, f"k=3 mismatch vs JAX reference, max abs err={err}"

    # Default Conv() config: k=1, s=1 (pointwise conv).
    w1 = jax.random.normal(kw_, (C2, C1, 1, 1), dtype=jnp.float32) * 0.1
    out1 = conv_bn_silu(x, w1, gamma, beta, running_mean, running_var,
                        k=1, s=1, p=None)
    out1 = jax.block_until_ready(out1)
    ref1 = _reference(x, w1, gamma, beta, running_mean, running_var,
                      k=1, s=1, p=None)
    assert out1.shape == ref1.shape == (N, C2, H, W)
    err1 = float(jnp.max(jnp.abs(out1 - ref1)))
    assert err1 < 2e-2, f"k=1 mismatch vs JAX reference, max abs err={err1}"

    print("KERNEL_OK")
</pallas_src>

<mosaic_0001>
module attributes {stable_mosaic.version = 11 : i64} {
  func.func @_conv_gemm_kernel(%arg0: i32, %arg1: i32, %arg2: i32, %arg3: memref<1x256x128xbf16, #tpu.memory_space<vmem>>, %arg4: memref<128x128xbf16, #tpu.memory_space<vmem>>, %arg5: memref<1x128xf32, #tpu.memory_space<vmem>>, %arg6: memref<1x128xf32, #tpu.memory_space<vmem>>, %arg7: memref<1x256x128xf32, #tpu.memory_space<vmem>>) attributes {dimension_semantics = [#tpu.dimension_semantics<parallel>, #tpu.dimension_semantics<parallel>, #tpu.dimension_semantics<parallel>], iteration_bounds = array<i64: 2, 1, 1>, scalar_prefetch = 0 : i64, scratch_operands = 0 : i64, tpu.core_type = #tpu.core_type<tc>, window_params = [{transform_indices = @transform_0, window_bounds = array<i64: 1, 256, 128>}, {transform_indices = @transform_1, window_bounds = array<i64: 128, 128>}, {transform_indices = @transform_2, window_bounds = array<i64: 1, 128>}, {transform_indices = @transform_3, window_bounds = array<i64: 1, 128>}, {transform_indices = @transform_4, window_bounds = array<i64: 1, 256, 128>}]} {
    %c0 = arith.constant 0 : index
    %c0_0 = arith.constant 0 : index
    %c0_1 = arith.constant 0 : index
    %0 = vector.load %arg3[%c0, %c0_0, %c0_1] : memref<1x256x128xbf16, #tpu.memory_space<vmem>>, vector<1x256x128xbf16>
    %1 = vector.shape_cast %0 : vector<1x256x128xbf16> to vector<256x128xbf16>
    %c0_2 = arith.constant 0 : index
    %c0_3 = arith.constant 0 : index
    %2 = vector.load %arg4[%c0_2, %c0_3] : memref<128x128xbf16, #tpu.memory_space<vmem>>, vector<128x128xbf16>
    %cst = arith.constant dense<0.000000e+00> : vector<256x128xf32>
    %3 = tpu.matmul %1, %2, %cst {dimension_numbers = #tpu.dot_dimension_numbers<[1], [0], [0], [1], [0, 0, 1, 1], [], []>} : vector<256x128xbf16>, vector<128x128xbf16>, vector<256x128xf32> -> vector<256x128xf32>
    %c0_4 = arith.constant 0 : index
    %c0_5 = arith.constant 0 : index
    %4 = vector.load %arg5[%c0_4, %c0_5] : memref<1x128xf32, #tpu.memory_space<vmem>>, vector<1x128xf32>
    %5 = vector.broadcast %4 : vector<1x128xf32> to vector<256x128xf32>
    %6 = arith.mulf %3, %5 : vector<256x128xf32>
    %c0_6 = arith.constant 0 : index
    %c0_7 = arith.constant 0 : index
    %7 = vector.load %arg6[%c0_6, %c0_7] : memref<1x128xf32, #tpu.memory_space<vmem>>, vector<1x128xf32>
    %8 = vector.broadcast %7 : vector<1x128xf32> to vector<256x128xf32>
    %9 = arith.addf %6, %8 : vector<256x128xf32>
    %10 = arith.negf %9 : vector<256x128xf32>
    %11 = math.exp %10 : vector<256x128xf32>
    %cst_8 = arith.constant 1.000000e+00 : f32
    %12 = vector.broadcast %cst_8 : f32 to vector<256x128xf32>
    %13 = arith.addf %12, %11 : vector<256x128xf32>
    %14 = arith.divf %12, %13 : vector<256x128xf32>
    %15 = arith.mulf %9, %14 : vector<256x128xf32>
    %c0_9 = arith.constant 0 : index
    %c0_10 = arith.constant 0 : index
    %c0_11 = arith.constant 0 : index
    %16 = vector.load %arg7[%c0_9, %c0_10, %c0_11] : memref<1x256x128xf32, #tpu.memory_space<vmem>>, vector<1x256x128xf32>
    %17 = vector.shape_cast %16 : vector<1x256x128xf32> to vector<256x128xf32>
    %18 = vector.shape_cast %15 : vector<256x128xf32> to vector<1x256x128xf32>
    tpu.vector_store %arg7[%c0_9, %c0_10, %c0_11], %18 {strides = array<i32>} : memref<1x256x128xf32, #tpu.memory_space<vmem>>, vector<1x256x128xf32>,
    return
  }
  func.func @transform_0(%arg0: i32, %arg1: i32, %arg2: i32) -> (i32, i32, i32) {
    %c0_i32 = arith.constant 0 : i32
    %c0_i32_0 = arith.constant 0 : i32
    return %arg0, %arg2, %c0_i32 : i32, i32, i32
  }
  func.func @transform_1(%arg0: i32, %arg1: i32, %arg2: i32) -> (i32, i32) {
    %c0_i32 = arith.constant 0 : i32
    %c0_i32_0 = arith.constant 0 : i32
    return %c0_i32, %arg1 : i32, i32
  }
  func.func @transform_2(%arg0: i32, %arg1: i32, %arg2: i32) -> (i32, i32) {
    %c0_i32 = arith.constant 0 : i32
    %c0_i32_0 = arith.constant 0 : i32
    return %c0_i32, %arg1 : i32, i32
  }
  func.func @transform_3(%arg0: i32, %arg1: i32, %arg2: i32) -> (i32, i32) {
    %c0_i32 = arith.constant 0 : i32
    %c0_i32_0 = arith.constant 0 : i32
    return %c0_i32, %arg1 : i32, i32
  }
  func.func @transform_4(%arg0: i32, %arg1: i32, %arg2: i32) -> (i32, i32, i32) {
    %c0_i32 = arith.constant 0 : i32
    return %arg0, %arg2, %arg1 : i32, i32, i32
  }
}

</mosaic_0001>

<llo_original>
// kernel: conv_bn_silu.1
$region0: #{conv_bn_silu.1}
  #allocation0 [shape = 'u32[]', space=smem, size = 0x4, offset = 0x4, fixed_abs, tag = 'smem constant byte address 0x4 - core index']
  #allocation1 [shape = 'u32[72,128]{1,0:T(1,128)}', space=vmem, size = 0x9000, scoped, tag = 'internal scratch']
  %s0 = inlined_call_operand.vmem [shape: bf16[2,256,128], index: 0, kind: input, shape index: {}]
  %s1 = inlined_call_operand.vmem [shape: bf16[128,128], index: 1, kind: input, shape index: {}]
  %s2 = inlined_call_operand.vmem [shape: f32[1,128], index: 2, kind: input, shape index: {}]
  %s3 = inlined_call_operand.vmem [shape: f32[1,128], index: 3, kind: input, shape index: {}]
  %s4 = inlined_call_operand.vmem [shape: f32[2,256,128], index: 4, kind: output, shape index: {}]
  %s5 = sld [smem:[#allocation0]]
  $region49: #{conv_bn_silu.1} parent=0
    _
  %s7 = ssub.s32 1, %s5
  %s8 = scalar_select 0, %s7, %s5
  loop: start=0, step=1, limit=4
  $region2: #{conv_bn_silu.1} parent=0 // loop_pre_header
    _
  $region3: #{conv_bn_silu.1} parent=0 // loop_header
    %s10 = sphi 0, %s14
    %p11 = scmp.ge.s32.totalorder %s10, 4
    %s17 = sphi 0, %s36
    %s18 = sphi 0, %s32
    %s19 = sphi 0, %s28
    %s20 = sphi 0, %s17
    %s21 = sphi 0, %s18
    %s22 = sphi 0, %s19
    %s23 = sphi 0, %s20
    %s24 = sphi 0, %s21
    %s25 = sphi 0, %s22
    %s41 = sphi 0, %s43
    %s44 = sphi 0, %s41
    %s45 = sphi 0, %s44
    %s61 = sphi 0, %s45
    %s67 = sphi 0, %s69
    %s70 = sphi 0, %s67
    %s71 = sphi 0, %s70
    %s87 = sphi 0, %s71
    %s93 = sphi 0, %s95
    %s96 = sphi 0, %s93
    %s97 = sphi 0, %s96
    %s113 = sphi 0, %s97
    %s119 = sphi 0, %s121
    %s122 = sphi 0, %s119
    %s123 = sphi 0, %s122
    %s139 = sphi 0, %s123
    %s149 = sphi 0, %s151
    %s152 = sphi 0, %s149
    %s153 = sphi 0, %s152
    %s169 = sphi 0, %s153
  $region4: #{conv_bn_silu.1} parent=0 // loop_header_branch
    %13 = sbr.rel (%p11) target = $region8
  $region5: #{conv_bn_silu.1} parent=0 // loop_body
    %s15 = ssub.s32 %s10, 1
    %s16 = ssub.s32 %s10, 2
    %s26 = sadd.s32 1, %s19
    %p27 = scmp.ge.s32.totalorder %s26, 1
    %s28 = scalar_select %p27, 0, %s26
    %s29 = sadd.s32 1, %s18
    %s30 = scalar_select %p27, %s29, %s18
    %p31 = scmp.ge.s32.totalorder %s30, 1
    %s32 = scalar_select %p31, 0, %s30
    %s33 = sadd.s32 1, %s17
    %s34 = scalar_select %p31, %s33, %s17
    %p35 = scmp.ge.s32.totalorder %s34, 2
    %s36 = scalar_select %p35, 0, %s34
    %s37 = ssub.s32 %s17, %s36
    %s38 = ssub.s32 %s19, %s28
    %s39 = sor.u32 %s37, %s38
    %p40 = scmp.eq.s32.totalorder %s39, 0
    %s42 = sadd.s32 %s41, 1
    %s43 = scalar_select %p40, %s41, %s42
    %p46 = pneg %p40
    %p47 = scmp.eq.s32.totalorder %s10, 1
    %p48 = por %p46, %p47
    %p49 = scmp.ne.s32.totalorder %s41, %s44
    %p50 = scmp.eq.s32.totalorder %s10, 0
    %p51 = por %p49, %p50
    %p52 = scmp.ne.s32.totalorder %s41, %s44
    %p53 = scmp.eq.s32.totalorder %s15, 1
    %p54 = por %p52, %p53
    %p55 = scmp.ne.s32.totalorder %s44, %s45
    %p56 = scmp.eq.s32.totalorder %s15, 0
    %p57 = por %p55, %p56
    %p58 = scmp.ne.s32.totalorder %s44, %s45
    %p59 = scmp.eq.s32.totalorder %s16, 1
    %p60 = por %p58, %p59
    %p62 = scmp.ne.s32.totalorder %s45, %s61
    %p63 = scmp.eq.s32.totalorder %s16, 0
    %p64 = por %p62, %p63
    %s65 = ssub.s32 %s18, %s32
    %p66 = scmp.eq.s32.totalorder %s65, 0
    %s68 = sadd.s32 %s67, 1
    %s69 = scalar_select %p66, %s67, %s68
    %p72 = pneg %p66
    %p73 = scmp.eq.s32.totalorder %s10, 1
    %p74 = por %p72, %p73
    %p75 = scmp.ne.s32.totalorder %s67, %s70
    %p76 = scmp.eq.s32.totalorder %s10, 0
    %p77 = por %p75, %p76
    %p78 = scmp.ne.s32.totalorder %s67, %s70
    %p79 = scmp.eq.s32.totalorder %s15, 1
    %p80 = por %p78, %p79
    %p81 = scmp.ne.s32.totalorder %s70, %s71
    %p82 = scmp.eq.s32.totalorder %s15, 0
    %p83 = por %p81, %p82
    %p84 = scmp.ne.s32.totalorder %s70, %s71
    %p85 = scmp.eq.s32.totalorder %s16, 1
    %p86 = por %p84, %p85
    %p88 = scmp.ne.s32.totalorder %s71, %s87
    %p89 = scmp.eq.s32.totalorder %s16, 0
    %p90 = por %p88, %p89
    %s91 = ssub.s32 %s18, %s32
    %p92 = scmp.eq.s32.totalorder %s91, 0
    %s94 = sadd.s32 %s93, 1
    %s95 = scalar_select %p92, %s93, %s94
    %p98 = pneg %p92
    %p99 = scmp.eq.s32.totalorder %s10, 1
    %p100 = por %p98, %p99
    %p101 = scmp.ne.s32.totalorder %s93, %s96
    %p102 = scmp.eq.s32.totalorder %s10, 0
    %p103 = por %p101, %p102
    %p104 = scmp.ne.s32.totalorder %s93, %s96
    %p105 = scmp.eq.s32.totalorder %s15, 1
    %p106 = por %p104, %p105
    %p107 = scmp.ne.s32.totalorder %s96, %s97
    %p108 = scmp.eq.s32.totalorder %s15, 0
    %p109 = por %p107, %p108
    %p110 = scmp.ne.s32.totalorder %s96, %s97
    %p111 = scmp.eq.s32.totalorder %s16, 1
    %p112 = por %p110, %p111
    %p114 = scmp.ne.s32.totalorder %s97, %s113
    %p115 = scmp.eq.s32.totalorder %s16, 0
    %p116 = por %p114, %p115
    %s117 = ssub.s32 %s18, %s32
    %p118 = scmp.eq.s32.totalorder %s117, 0
    %s120 = sadd.s32 %s119, 1
    %s121 = scalar_select %p118, %s119, %s120
    %p124 = pneg %p118
    %p125 = scmp.eq.s32.totalorder %s10, 1
    %p126 = por %p124, %p125
    %p127 = scmp.ne.s32.totalorder %s119, %s122
    %p128 = scmp.eq.s32.totalorder %s10, 0
    %p129 = por %p127, %p128
    %p130 = scmp.ne.s32.totalorder %s119, %s122
    %p131 = scmp.eq.s32.totalorder %s15, 1
    %p132 = por %p130, %p131
    %p133 = scmp.ne.s32.totalorder %s122, %s123
    %p134 = scmp.eq.s32.totalorder %s15, 0
    %p135 = por %p133, %p134
    %p136 = scmp.ne.s32.totalorder %s122, %s123
    %p137 = scmp.eq.s32.totalorder %s16, 1
    %p138 = por %p136, %p137
    %p140 = scmp.ne.s32.totalorder %s123, %s139
    %p141 = scmp.eq.s32.totalorder %s16, 0
    %p142 = por %p140, %p141
    %s143 = ssub.s32 %s17, %s36
    %s144 = ssub.s32 %s19, %s28
    %s145 = sor.u32 %s143, %s144
    %s146 = ssub.s32 %s18, %s32
    %s147 = sor.u32 %s145, %s146
    %p148 = scmp.eq.s32.totalorder %s147, 0
    %s150 = sadd.s32 %s149, 1
    %s151 = scalar_select %p148, %s149, %s150
    %p154 = pneg %p148
    %p155 = scmp.eq.s32.totalorder %s10, 1
    %p156 = por %p154, %p155
    %p157 = scmp.ne.s32.totalorder %s149, %s152
    %p158 = scmp.eq.s32.totalorder %s10, 0
    %p159 = por %p157, %p158
    %p160 = scmp.ne.s32.totalorder %s149, %s152
    %p161 = scmp.eq.s32.totalorder %s15, 1
    %p162 = por %p160, %p161
    %p163 = scmp.ne.s32.totalorder %s152, %s153
    %p164 = scmp.eq.s32.totalorder %s15, 0
    %p165 = por %p163, %p164
    %p166 = scmp.ne.s32.totalorder %s152, %s153
    %p167 = scmp.eq.s32.totalorder %s16, 1
    %p168 = por %p166, %p167
    %p170 = scmp.ne.s32.totalorder %s153, %s169
    %p171 = scmp.eq.s32.totalorder %s16, 0
    %p172 = por %p170, %p171
    %p173 = scmp.le.s32.totalorder 1, %s10
    %p174 = scmp.lt.s32.totalorder %s10, 3
    %p175 = pnand %p173, %p174
    %p176 = pneg %p175
    // Predicated region
    $region9: #{conv_bn_silu.1} parent=5 // pred_check
      _
    $region10: #{conv_bn_silu.1} parent=5 // pred_check_branch
      %178 = sbr.rel (%p175) target = $region12
    $region11: #{conv_bn_silu.1} parent=5 // pred_region
      %s179 = ssub.s32 %s10, 1
      // Predicated region
      $region13: #{conv_bn_silu.1} parent=11 // pred_check
        %p180 = pneg %p83
      $region14: #{conv_bn_silu.1} parent=11 // pred_check_branch
        %182 = sbr.rel (%p180) target = $region16
      $region15: #{conv_bn_silu.1} parent=11 // pred_region
        %p183 = scmp.lt.s32.totalorder %s21, 0
        %s184 = scalar_select %p183, %s21, 0
        %s185 = smul.addr %s184, 4
        %s186 = scalar_lea.vmem %s1, %s185
      $region16: #{conv_bn_silu.1} parent=11 // pred_fallthru
        _
      // Predicated region
      $region17: #{conv_bn_silu.1} parent=11 // pred_check
        %p187 = pneg %p109
      $region18: #{conv_bn_silu.1} parent=11 // pred_check_branch
        %189 = sbr.rel (%p187) target = $region20
      $region19: #{conv_bn_silu.1} parent=11 // pred_region
        %p190 = scmp.lt.s32.totalorder %s21, 0
        %s191 = scalar_select %p190, %s21, 0
        %s192 = scalar_lea.vmem %s2, %s191
      $region20: #{conv_bn_silu.1} parent=11 // pred_fallthru
        _
      // Predicated region
      $region21: #{conv_bn_silu.1} parent=11 // pred_check
        %p193 = pneg %p135
      $region22: #{conv_bn_silu.1} parent=11 // pred_check_branch
        %195 = sbr.rel (%p193) target = $region24
      $region23: #{conv_bn_silu.1} parent=11 // pred_region
        %p196 = scmp.lt.s32.totalorder %s21, 0
        %s197 = scalar_select %p196, %s21, 0
        %s198 = scalar_lea.vmem %s3, %s197
      $region24: #{conv_bn_silu.1} parent=11 // pred_fallthru
        _
    $region12: #{conv_bn_silu.1} parent=5 // pred_fallthru
      _
    %p199 = scmp.lt.s32.totalorder %s10, 2
    // Predicated region
    $region25: #{conv_bn_silu.1} parent=5 // pred_check
      %p200 = pneg %p199
    $region26: #{conv_bn_silu.1} parent=5 // pred_check_branch
      %202 = sbr.rel (%p200) target = $region28
    $region27: #{conv_bn_silu.1} parent=5 // pred_region
      // Predicated region
      $region29: #{conv_bn_silu.1} parent=27 // pred_check
        %p203 = pneg %p51
      $region30: #{conv_bn_silu.1} parent=27 // pred_check_branch
        %205 = sbr.rel (%p203) target = $region32
      $region31: #{conv_bn_silu.1} parent=27 // pred_region
        %s206 = smul.u32 32, %s19
        %p207 = scmp.lt.s32.totalorder %s17, 1
        %s208 = scalar_select %p207, %s17, 1
        %p209 = scmp.lt.s32.totalorder %s206, 31
        %s210 = scalar_select %p209, %s206, 31
        %s211 = smul.addr %s208, 32
        %s212 = sadd.s32 %s210, %s211
        %s213 = smul.addr %s212, 4
        %s214 = scalar_lea.vmem %s0, %s213
        %s215 = smul.u32 32, %s19
      $region32: #{conv_bn_silu.1} parent=27 // pred_fallthru
        _
    $region28: #{conv_bn_silu.1} parent=5 // pred_fallthru
      _
    %p216 = scmp.le.s32.totalorder 1, %s10
    %p217 = scmp.lt.s32.totalorder %s10, 3
    %p218 = pnand %p216, %p217
    %p219 = pneg %p218
    // Predicated region
    $region33: #{conv_bn_silu.1} parent=5 // pred_check
      _
    $region34: #{conv_bn_silu.1} parent=5 // pred_check_branch
      %221 = sbr.rel (%p218) target = $region36
    $region35: #{conv_bn_silu.1} parent=5 // pred_region
      %s222 = ssub.s32 %s10, 1
      %s223 = smul.u32 32, %s22
      %p224 = scmp.lt.s32.totalorder %s20, 1
      %s225 = scalar_select %p224, %s20, 1
      %p226 = scmp.lt.s32.totalorder %s223, 31
      %s227 = scalar_select %p226, %s223, 31
      %s228 = smul.addr %s225, 32
      %s229 = sadd.s32 %s227, %s228
      %s230 = smul.addr %s229, 4
      %s231 = scalar_lea.vmem %s0, %s230
      %p232 = pneg %p57
      %p233 = pneg %p54
      %p234 = scmp.lt.s32.totalorder %s21, 0
      %s235 = scalar_select %p234, %s21, 0
      %s236 = smul.addr %s235, 4
      %s237 = scalar_lea.vmem %s1, %s236
      %p238 = pneg %p83
      %p239 = pneg %p80
      %p240 = scmp.lt.s32.totalorder %s21, 0
      %s241 = scalar_select %p240, %s21, 0
      %s242 = scalar_lea.vmem %s2, %s241
      %p243 = pneg %p109
      %p244 = pneg %p106
      %p245 = scmp.lt.s32.totalorder %s21, 0
      %s246 = scalar_select %p245, %s21, 0
      %s247 = scalar_lea.vmem %s3, %s246
      %p248 = pneg %p135
      %p249 = pneg %p132
      %p250 = pneg %p165
      %p251 = pneg %p162
      %s252 = smul.u32 32, %s22
      %p253 = scmp.lt.s32.totalorder %s20, 1
      %s254 = scalar_select %p253, %s20, 1
      %p255 = scmp.lt.s32.totalorder %s252, 31
      %s256 = scalar_select %p255, %s252, 31
      %p257 = scmp.lt.s32.totalorder %s21, 0
      %s258 = scalar_select %p257, %s21, 0
      %s259 = sadd.s32 %s258, %s256
      %s260 = smul.addr %s254, 32
      %s261 = sadd.s32 %s259, %s260
      %s262 = smul.addr %s261, 8
      %s263 = scalar_lea.vmem %s4, %s262
      %s264 = smul.u32 32, %s22
      %p265 = scmp.lt.s32.totalorder %s20, 1
      %s266 = scalar_select %p265, %s20, 1
      %p267 = scmp.lt.s32.totalorder %s264, 31
      %s268 = scalar_select %p267, %s264, 31
      %s269 = smul.addr %s266, 32
      %s270 = sadd.s32 %s268, %s269
      %s271 = smul.addr %s270, 4
      %s272 = scalar_lea.vmem %s0, %s271
      %s273 = smul.u32 32, %s22
      %p274 = scmp.lt.s32.totalorder %s21, 0
      %s275 = scalar_select %p274, %s21, 0
      %s276 = smul.addr %s275, 4
      %s277 = scalar_lea.vmem %s1, %s276
      %p278 = scmp.lt.s32.totalorder %s21, 0
      %s279 = scalar_select %p278, %s21, 0
      %s280 = scalar_lea.vmem %s2, %s279
      %p281 = scmp.lt.s32.totalorder %s21, 0
      %s282 = scalar_select %p281, %s21, 0
      %s283 = scalar_lea.vmem %s3, %s282
      %s284 = smul.u32 32, %s22
      %p285 = scmp.lt.s32.totalorder %s20, 1
      %s286 = scalar_select %p285, %s20, 1
      %p287 = scmp.lt.s32.totalorder %s284, 31
      %s288 = scalar_select %p287, %s284, 31
      %p289 = scmp.lt.s32.totalorder %s21, 0
      %s290 = scalar_select %p289, %s21, 0
      %s291 = sadd.s32 %s290, %s288
      %s292 = smul.addr %s286, 32
      %s293 = sadd.s32 %s291, %s292
      %s294 = smul.addr %s293, 8
      %s295 = scalar_lea.vmem %s4, %s294
      %s296 = smul.u32 32, %s22
      %v297 = vld [vmem:[%s272] sm:$0xf]
      %v298 = vld [vmem:[%s272 + $0x4] sm:$0xf]
      %v299 = vld [vmem:[%s272 + $0x8] sm:$0xf]
      %v300 = vld [vmem:[%s272 + $0xc] sm:$0xf]
      %v301 = vld [vmem:[%s272 + $0x10] sm:$0xf]
      %v302 = vld [vmem:[%s272 + $0x14] sm:$0xf]
      %v303 = vld [vmem:[%s272 + $0x18] sm:$0xf]
      %v304 = vld [vmem:[%s272 + $0x1c] sm:$0xf]
      %v305 = vld [vmem:[%s272 + $0x20] sm:$0xf]
      %v306 = vld [vmem:[%s272 + $0x24] sm:$0xf]
      %v307 = vld [vmem:[%s272 + $0x28] sm:$0xf]
      %v308 = vld [vmem:[%s272 + $0x2c] sm:$0xf]
      %v309 = vld [vmem:[%s272 + $0x30] sm:$0xf]
      %v310 = vld [vmem:[%s272 + $0x34] sm:$0xf]
      %v311 = vld [vmem:[%s272 + $0x38] sm:$0xf]
      %v312 = vld [vmem:[%s272 + $0x3c] sm:$0xf]
      %v313 = vld [vmem:[%s272 + $0x40] sm:$0xf]
      %v314 = vld [vmem:[%s272 + $0x44] sm:$0xf]
      %v315 = vld [vmem:[%s272 + $0x48] sm:$0xf]
      %v316 = vld [vmem:[%s272 + $0x4c] sm:$0xf]
      %v317 = vld [vmem:[%s272 + $0x50] sm:$0xf]
      %v318 = vld [vmem:[%s272 + $0x54] sm:$0xf]
      %v319 = vld [vmem:[%s272 + $0x58] sm:$0xf]
      %v320 = vld [vmem:[%s272 + $0x5c] sm:$0xf]
      %v321 = vld [vmem:[%s272 + $0x60] sm:$0xf]
      %v322 = vld [vmem:[%s272 + $0x64] sm:$0xf]
      %v323 = vld [vmem:[%s272 + $0x68] sm:$0xf]
      %v324 = vld [vmem:[%s272 + $0x6c] sm:$0xf]
      %v325 = vld [vmem:[%s272 + $0x70] sm:$0xf]
      %v326 = vld [vmem:[%s272 + $0x74] sm:$0xf]
      %v327 = vld [vmem:[%s272 + $0x78] sm:$0xf]
      %v328 = vld [vmem:[%s272 + $0x7c] sm:$0xf]
      %v329 = vld [vmem:[%s277] sm:$0xf]
      %v330 = vld [vmem:[%s277 + $0x4] sm:$0xf]
      %v331 = vld [vmem:[%s277 + $0x8] sm:$0xf]
      %v332 = vld [vmem:[%s277 + $0xc] sm:$0xf]
      %v333 = vld [vmem:[%s277 + $0x10] sm:$0xf]
      %v334 = vld [vmem:[%s277 + $0x14] sm:$0xf]
      %v335 = vld [vmem:[%s277 + $0x18] sm:$0xf]
      %v336 = vld [vmem:[%s277 + $0x1c] sm:$0xf]
      %v337 = vld [vmem:[%s277 + $0x20] sm:$0xf]
      %v338 = vld [vmem:[%s277 + $0x24] sm:$0xf]
      %v339 = vld [vmem:[%s277 + $0x28] sm:$0xf]
      %v340 = vld [vmem:[%s277 + $0x2c] sm:$0xf]
      %v341 = vld [vmem:[%s277 + $0x30] sm:$0xf]
      %v342 = vld [vmem:[%s277 + $0x34] sm:$0xf]
      %v343 = vld [vmem:[%s277 + $0x38] sm:$0xf]
      %v344 = vld [vmem:[%s277 + $0x3c] sm:$0xf]
      %v377 = vunpack.c.l.b16 %v297
      %v378 = vunpack.c.l.b16 %v298
      %v379 = vunpack.c.l.b16 %v299
      %v380 = vunpack.c.l.b16 %v300
      %v381 = vunpack.c.l.b16 %v301
      %v382 = vunpack.c.l.b16 %v302
      %v383 = vunpack.c.l.b16 %v303
      %v384 = vunpack.c.l.b16 %v304
      %v385 = vunpack.c.l.b16 %v305
      %v386 = vunpack.c.l.b16 %v306
      %v387 = vunpack.c.l.b16 %v307
      %v388 = vunpack.c.l.b16 %v308
      %v389 = vunpack.c.l.b16 %v309
      %v390 = vunpack.c.l.b16 %v310
      %v391 = vunpack.c.l.b16 %v311
      %v392 = vunpack.c.l.b16 %v312
      %v393 = vunpack.c.l.b16 %v313
      %v394 = vunpack.c.l.b16 %v314
      %v395 = vunpack.c.l.b16 %v315
      %v396 = vunpack.c.l.b16 %v316
      %v397 = vunpack.c.l.b16 %v317
      %v398 = vunpack.c.l.b16 %v318
      %v399 = vunpack.c.l.b16 %v319
      %v400 = vunpack.c.l.b16 %v320
      %v401 = vunpack.c.l.b16 %v321
      %v402 = vunpack.c.l.b16 %v322
      %v403 = vunpack.c.l.b16 %v323
      %v404 = vunpack.c.l.b16 %v324
      %v405 = vunpack.c.l.b16 %v325
      %v406 = vunpack.c.l.b16 %v326
      %v407 = vunpack.c.l.b16 %v327
      %v408 = vunpack.c.l.b16 %v328
      %v409 = vpack.c.b16 %v378, %v377
      %v410 = vpack.c.b16 %v380, %v379
      %v411 = vpack.c.b16 %v382, %v381
      %v412 = vpack.c.b16 %v384, %v383
      %v413 = vpack.c.b16 %v386, %v385
      %v414 = vpack.c.b16 %v388, %v387
      %v415 = vpack.c.b16 %v390, %v389
      %v416 = vpack.c.b16 %v392, %v391
      %v417 = vpack.c.b16 %v394, %v393
      %v418 = vpack.c.b16 %v396, %v395
      %v419 = vpack.c.b16 %v398, %v397
      %v420 = vpack.c.b16 %v400, %v399
      %v421 = vpack.c.b16 %v402, %v401
      %v422 = vpack.c.b16 %v404, %v403
      %v423 = vpack.c.b16 %v406, %v405
      %v424 = vpack.c.b16 %v408, %v407
      %v457 = vunpack.c.l.b16 %v329
      %v458 = vunpack.c.l.b16 %v330
      %v459 = vunpack.c.l.b16 %v331
      %v460 = vunpack.c.l.b16 %v332
      %v461 = vunpack.c.l.b16 %v333
      %v462 = vunpack.c.l.b16 %v334
      %v463 = vunpack.c.l.b16 %v335
      %v464 = vunpack.c.l.b16 %v336
      %v465 = vunpack.c.l.b16 %v337
      %v466 = vunpack.c.l.b16 %v338
      %v467 = vunpack.c.l.b16 %v339
      %v468 = vunpack.c.l.b16 %v340
      %v469 = vunpack.c.l.b16 %v341
      %v470 = vunpack.c.l.b16 %v342
      %v471 = vunpack.c.l.b16 %v343
      %v472 = vunpack.c.l.b16 %v344
      %v473 = vpack.c.b16 %v458, %v457
      %v474 = vpack.c.b16 %v460, %v459
      %v475 = vpack.c.b16 %v462, %v461
      %v476 = vpack.c.b16 %v464, %v463
      %v477 = vpack.c.b16 %v466, %v465
      %v478 = vpack.c.b16 %v468, %v467
      %v479 = vpack.c.b16 %v470, %v469
      %v480 = vpack.c.b16 %v472, %v471
      %489 = vmatpush.bf16.msra.mxu0 %v480
      %490 = vmatpush.bf16.msra.mxu0 %v479
      %491 = vmatpush.bf16.msra.mxu0 %v478
      %492 = vmatpush.bf16.msra.mxu0 %v477
      %493 = vmatpush.bf16.msra.mxu0 %v476
      %494 = vmatpush.bf16.msra.mxu0 %v475
      %495 = vmatpush.bf16.msra.mxu0 %v474
      %496 = vmatpush.bf16.msra.mxu0 %v473
      %497 = vmatmul.bf16.gmra.mxu0 %v409
      %v498 = vpop.f32.mrf.mxu0
      %v499 = vadd.f32 0.0, %v498
      %v500 = vpop.f32.mrf.mxu0
      %v501 = vadd.f32 0.0, %v500
      %502 = vmatmul.bf16.gmra.mxu0 %v410
      %v503 = vpop.f32.mrf.mxu0
      %v504 = vadd.f32 0.0, %v503
      %v505 = vpop.f32.mrf.mxu0
      %v506 = vadd.f32 0.0, %v505
      %507 = vmatmul.bf16.gmra.mxu0 %v411
      %v508 = vpop.f32.mrf.mxu0
      %v509 = vadd.f32 0.0, %v508
      %v510 = vpop.f32.mrf.mxu0
      %v511 = vadd.f32 0.0, %v510
      %512 = vmatmul.bf16.gmra.mxu0 %v412
      %v513 = vpop.f32.mrf.mxu0
      %v514 = vadd.f32 0.0, %v513
      %v515 = vpop.f32.mrf.mxu0
      %v516 = vadd.f32 0.0, %v515
      %517 = vmatmul.bf16.gmra.mxu0 %v413
      %v518 = vpop.f32.mrf.mxu0
      %v519 = vadd.f32 0.0, %v518
      %v520 = vpop.f32.mrf.mxu0
      %v521 = vadd.f32 0.0, %v520
      %522 = vmatmul.bf16.gmra.mxu0 %v414
      %v523 = vpop.f32.mrf.mxu0
      %v524 = vadd.f32 0.0, %v523
      %v525 = vpop.f32.mrf.mxu0
      %v526 = vadd.f32 0.0, %v525
      %527 = vmatmul.bf16.gmra.mxu0 %v415
      %v528 = vpop.f32.mrf.mxu0
      %v529 = vadd.f32 0.0, %v528
      %v530 = vpop.f32.mrf.mxu0
      %v531 = vadd.f32 0.0, %v530
      %532 = vmatmul.bf16.gmra.mxu0 %v416
      %v533 = vpop.f32.mrf.mxu0
      %v534 = vadd.f32 0.0, %v533
      %v535 = vpop.f32.mrf.mxu0
      %v536 = vadd.f32 0.0, %v535
      %537 = vmatmul.bf16.gmra.mxu0 %v417
      %v538 = vpop.f32.mrf.mxu0
      %v539 = vadd.f32 0.0, %v538
      %v540 = vpop.f32.mrf.mxu0
      %v541 = vadd.f32 0.0, %v540
      %542 = vmatmul.bf16.gmra.mxu0 %v418
      %v543 = vpop.f32.mrf.mxu0
      %v544 = vadd.f32 0.0, %v543
      %v545 = vpop.f32.mrf.mxu0
      %v546 = vadd.f32 0.0, %v545
      %547 = vmatmul.bf16.gmra.mxu0 %v419
      %v548 = vpop.f32.mrf.mxu0
      %v549 = vadd.f32 0.0, %v548
      %v550 = vpop.f32.mrf.mxu0
      %v551 = vadd.f32 0.0, %v550
      %552 = vmatmul.bf16.gmra.mxu0 %v420
      %v553 = vpop.f32.mrf.mxu0
      %v554 = vadd.f32 0.0, %v553
      %v555 = vpop.f32.mrf.mxu0
      %v556 = vadd.f32 0.0, %v555
      %557 = vmatmul.bf16.gmra.mxu0 %v421
      %v558 = vpop.f32.mrf.mxu0
      %v559 = vadd.f32 0.0, %v558
      %v560 = vpop.f32.mrf.mxu0
      %v561 = vadd.f32 0.0, %v560
      %562 = vmatmul.bf16.gmra.mxu0 %v422
      %v563 = vpop.f32.mrf.mxu0
      %v564 = vadd.f32 0.0, %v563
      %v565 = vpop.f32.mrf.mxu0
      %v566 = vadd.f32 0.0, %v565
      %567 = vmatmul.bf16.gmra.mxu0 %v423
      %v568 = vpop.f32.mrf.mxu0
      %v569 = vadd.f32 0.0, %v568
      %v570 = vpop.f32.mrf.mxu0
      %v571 = vadd.f32 0.0, %v570
      %572 = vmatmul.bf16.gmra.mxu0 %v424
      %v573 = vpop.f32.mrf.mxu0
      %v574 = vadd.f32 0.0, %v573
      %v575 = vpop.f32.mrf.mxu0
      %v576 = vadd.f32 0.0, %v575
      %577 = vdwg.mxu0
      %v578 = vld [vmem:[%s280] sm:$0x1]
      %v580 = vperm.slane %v578, 0
      %v582 = vmul.f32 %v499, %v580
      %v583 = vmul.f32 %v501, %v580
      %v584 = vmul.f32 %v504, %v580
      %v585 = vmul.f32 %v506, %v580
      %v586 = vmul.f32 %v509, %v580
      %v587 = vmul.f32 %v511, %v580
      %v588 = vmul.f32 %v514, %v580
      %v589 = vmul.f32 %v516, %v580
      %v590 = vmul.f32 %v519, %v580
      %v591 = vmul.f32 %v521, %v580
      %v592 = vmul.f32 %v524, %v580
      %v593 = vmul.f32 %v526, %v580
      %v594 = vmul.f32 %v529, %v580
      %v595 = vmul.f32 %v531, %v580
      %v596 = vmul.f32 %v534, %v580
      %v597 = vmul.f32 %v536, %v580
      %v598 = vmul.f32 %v539, %v580
      %v599 = vmul.f32 %v541, %v580
      %v600 = vmul.f32 %v544, %v580
      %v601 = vmul.f32 %v546, %v580
      %v602 = vmul.f32 %v549, %v580
      %v603 = vmul.f32 %v551, %v580
      %v604 = vmul.f32 %v554, %v580
      %v605 = vmul.f32 %v556, %v580
      %v606 = vmul.f32 %v559, %v580
      %v607 = vmul.f32 %v561, %v580
      %v608 = vmul.f32 %v564, %v580
      %v609 = vmul.f32 %v566, %v580
      %v610 = vmul.f32 %v569, %v580
      %v611 = vmul.f32 %v571, %v580
      %v612 = vmul.f32 %v574, %v580
      %v613 = vmul.f32 %v576, %v580
      %v614 = vld [vmem:[%s283] sm:$0x1]
      %v616 = vperm.slane %v614, 0
      %v618 = vadd.f32 %v582, %v616
      %v619 = vadd.f32 %v583, %v616
      %v620 = vadd.f32 %v584, %v616
      %v621 = vadd.f32 %v585, %v616
      %v622 = vadd.f32 %v586, %v616
      %v623 = vadd.f32 %v587, %v616
      %v624 = vadd.f32 %v588, %v616
      %v625 = vadd.f32 %v589, %v616
      %v626 = vadd.f32 %v590, %v616
      %v627 = vadd.f32 %v591, %v616
      %v628 = vadd.f32 %v592, %v616
      %v629 = vadd.f32 %v593, %v616
      %v630 = vadd.f32 %v594, %v616
      %v631 = vadd.f32 %v595, %v616
      %v632 = vadd.f32 %v596, %v616
      %v633 = vadd.f32 %v597, %v616
      %v634 = vadd.f32 %v598, %v616
      %v635 = vadd.f32 %v599, %v616
      %v636 = vadd.f32 %v600, %v616
      %v637 = vadd.f32 %v601, %v616
      %v638 = vadd.f32 %v602, %v616
      %v639 = vadd.f32 %v603, %v616
      %v640 = vadd.f32 %v604, %v616
      %v641 = vadd.f32 %v605, %v616
      %v642 = vadd.f32 %v606, %v616
      %v643 = vadd.f32 %v607, %v616
      %v644 = vadd.f32 %v608, %v616
      %v645 = vadd.f32 %v609, %v616
      %v646 = vadd.f32 %v610, %v616
      %v647 = vadd.f32 %v611, %v616
      %v648 = vadd.f32 %v612, %v616
      %v649 = vadd.f32 %v613, %v616
      %v650 = vxor.u32 %v618, 2147483648
      %v651 = vxor.u32 %v619, 2147483648
      %v652 = vxor.u32 %v620, 2147483648
      %v653 = vxor.u32 %v621, 2147483648
      %v654 = vxor.u32 %v622, 2147483648
      %v655 = vxor.u32 %v623, 2147483648
      %v656 = vxor.u32 %v624, 2147483648
      %v657 = vxor.u32 %v625, 2147483648
      %v658 = vxor.u32 %v626, 2147483648
      %v659 = vxor.u32 %v627, 2147483648
      %v660 = vxor.u32 %v628, 2147483648
      %v661 = vxor.u32 %v629, 2147483648
      %v662 = vxor.u32 %v630, 2147483648
      %v663 = vxor.u32 %v631, 2147483648
      %v664 = vxor.u32 %v632, 2147483648
      %v665 = vxor.u32 %v633, 2147483648
      %v666 = vxor.u32 %v634, 2147483648
      %v667 = vxor.u32 %v635, 2147483648
      %v668 = vxor.u32 %v636, 2147483648
      %v669 = vxor.u32 %v637, 2147483648
      %v670 = vxor.u32 %v638, 2147483648
      %v671 = vxor.u32 %v639, 2147483648
      %v672 = vxor.u32 %v640, 2147483648
      %v673 = vxor.u32 %v641, 2147483648
      %v674 = vxor.u32 %v642, 2147483648
      %v675 = vxor.u32 %v643, 2147483648
      %v676 = vxor.u32 %v644, 2147483648
      %v677 = vxor.u32 %v645, 2147483648
      %v678 = vxor.u32 %v646, 2147483648
      %v679 = vxor.u32 %v647, 2147483648
      %v680 = vxor.u32 %v648, 2147483648
      %v681 = vxor.u32 %v649, 2147483648
      %v682 = vmul.f32 %v650, 1.442695
      %v683 = vpow.pop %v682
      %v684 = vmul.f32 %v651, 1.442695
      %v685 = vpow.pop %v684
      %v686 = vmul.f32 %v652, 1.442695
      %v687 = vpow.pop %v686
      %v688 = vmul.f32 %v653, 1.442695
      %v689 = vpow.pop %v688
      %v690 = vmul.f32 %v654, 1.442695
      %v691 = vpow.pop %v690
      %v692 = vmul.f32 %v655, 1.442695
      %v693 = vpow.pop %v692
      %v694 = vmul.f32 %v656, 1.442695
      %v695 = vpow.pop %v694
      %v696 = vmul.f32 %v657, 1.442695
      %v697 = vpow.pop %v696
      %v698 = vmul.f32 %v658, 1.442695
      %v699 = vpow.pop %v698
      %v700 = vmul.f32 %v659, 1.442695
      %v701 = vpow.pop %v700
      %v702 = vmul.f32 %v660, 1.442695
      %v703 = vpow.pop %v702
      %v704 = vmul.f32 %v661, 1.442695
      %v705 = vpow.pop %v704
      %v706 = vmul.f32 %v662, 1.442695
      %v707 = vpow.pop %v706
      %v708 = vmul.f32 %v663, 1.442695
      %v709 = vpow.pop %v708
      %v710 = vmul.f32 %v664, 1.442695
      %v711 = vpow.pop %v710
      %v712 = vmul.f32 %v665, 1.442695
      %v713 = vpow.pop %v712
      %v714 = vmul.f32 %v666, 1.442695
      %v715 = vpow.pop %v714
      %v716 = vmul.f32 %v667, 1.442695
      %v717 = vpow.pop %v716
      %v718 = vmul.f32 %v668, 1.442695
      %v719 = vpow.pop %v718
      %v720 = vmul.f32 %v669, 1.442695
      %v721 = vpow.pop %v720
      %v722 = vmul.f32 %v670, 1.442695
      %v723 = vpow.pop %v722
      %v724 = vmul.f32 %v671, 1.442695
      %v725 = vpow.pop %v724
      %v726 = vmul.f32 %v672, 1.442695
      %v727 = vpow.pop %v726
      %v728 = vmul.f32 %v673, 1.442695
      %v729 = vpow.pop %v728
      %v730 = vmul.f32 %v674, 1.442695
      %v731 = vpow.pop %v730
      %v732 = vmul.f32 %v675, 1.442695
      %v733 = vpow.pop %v732
      %v734 = vmul.f32 %v676, 1.442695
      %v735 = vpow.pop %v734
      %v736 = vmul.f32 %v677, 1.442695
      %v737 = vpow.pop %v736
      %v738 = vmul.f32 %v678, 1.442695
      %v739 = vpow.pop %v738
      %v740 = vmul.f32 %v679, 1.442695
      %v741 = vpow.pop %v740
      %v742 = vmul.f32 %v680, 1.442695
      %v743 = vpow.pop %v742
      %v744 = vmul.f32 %v681, 1.442695
      %v745 = vpow.pop %v744
      %v746 = vadd.f32 %v683, 1.0
      %v747 = vadd.f32 %v685, 1.0
      %v748 = vadd.f32 %v687, 1.0
      %v749 = vadd.f32 %v689, 1.0
      %v750 = vadd.f32 %v691, 1.0
      %v751 = vadd.f32 %v693, 1.0
      %v752 = vadd.f32 %v695, 1.0
      %v753 = vadd.f32 %v697, 1.0
      %v754 = vadd.f32 %v699, 1.0
      %v755 = vadd.f32 %v701, 1.0
      %v756 = vadd.f32 %v703, 1.0
      %v757 = vadd.f32 %v705, 1.0
      %v758 = vadd.f32 %v707, 1.0
      %v759 = vadd.f32 %v709, 1.0
      %v760 = vadd.f32 %v711, 1.0
      %v761 = vadd.f32 %v713, 1.0
      %v762 = vadd.f32 %v715, 1.0
      %v763 = vadd.f32 %v717, 1.0
      %v764 = vadd.f32 %v719, 1.0
      %v765 = vadd.f32 %v721, 1.0
      %v766 = vadd.f32 %v723, 1.0
      %v767 = vadd.f32 %v725, 1.0
      %v768 = vadd.f32 %v727, 1.0
      %v769 = vadd.f32 %v729, 1.0
      %v770 = vadd.f32 %v731, 1.0
      %v771 = vadd.f32 %v733, 1.0
      %v772 = vadd.f32 %v735, 1.0
      %v773 = vadd.f32 %v737, 1.0
      %v774 = vadd.f32 %v739, 1.0
      %v775 = vadd.f32 %v741, 1.0
      %v776 = vadd.f32 %v743, 1.0
      %v777 = vadd.f32 %v745, 1.0
      %v778 = vrcp.pop %v746
      %v779 = vmul.f32 %v746, %v778
      %v780 = vsub.f32 1.0, %v779
      %v781 = vmul.f32 %v778, %v780
      %v782 = vadd.f32 %v778, %v781
      %vm783 = vweird.f32 %v746
      %vm784 = vweird.f32 %v778
      %vm785 = vmor %vm783, %vm784
      %v786 = vsel %vm785, %v778, %v782
      %v787 = vand.u32 2147483647, %v746
      %vm788 = vcmp.eq.f32.partialorder %v787, 8.507059e+37
      %v789 = vand.u32 %v746, 2147483648
      %v790 = vor.u32 1.1754944e-38, %v789
      %v791 = vsel %vm788, %v790, %v786
      %v792 = vmul.f32 1.0, %v791
      %v793 = vrcp.pop %v747
      %v794 = vmul.f32 %v747, %v793
      %v795 = vsub.f32 1.0, %v794
      %v796 = vmul.f32 %v793, %v795
      %v797 = vadd.f32 %v793, %v796
      %vm798 = vweird.f32 %v747
      %vm799 = vweird.f32 %v793
      %vm800 = vmor %vm798, %vm799
      %v801 = vsel %vm800, %v793, %v797
      %v802 = vand.u32 2147483647, %v747
      %vm803 = vcmp.eq.f32.partialorder %v802, 8.507059e+37
      %v804 = vand.u32 %v747, 2147483648
      %v805 = vor.u32 1.1754944e-38, %v804
      %v806 = vsel %vm803, %v805, %v801
      %v807 = vmul.f32 1.0, %v806
      %v808 = vrcp.pop %v748
      %v809 = vmul.f32 %v748, %v808
      %v810 = vsub.f32 1.0, %v809
      %v811 = vmul.f32 %v808, %v810
      %v812 = vadd.f32 %v808, %v811
      %vm813 = vweird.f32 %v748
      %vm814 = vweird.f32 %v808
      %vm815 = vmor %vm813, %vm814
      %v816 = vsel %vm815, %v808, %v812
      %v817 = vand.u32 2147483647, %v748
      %vm818 = vcmp.eq.f32.partialorder %v817, 8.507059e+37
      %v819 = vand.u32 %v748, 2147483648
      %v820 = vor.u32 1.1754944e-38, %v819
      %v821 = vsel %vm818, %v820, %v816
      %v822 = vmul.f32 1.0, %v821
      %v823 = vrcp.pop %v749
      %v824 = vmul.f32 %v749, %v823
      %v825 = vsub.f32 1.0, %v824
      %v826 = vmul.f32 %v823, %v825
      %v827 = vadd.f32 %v823, %v826
      %vm828 = vweird.f32 %v749
      %vm829 = vweird.f32 %v823
      %vm830 = vmor %vm828, %vm829
      %v831 = vsel %vm830, %v823, %v827
      %v832 = vand.u32 2147483647, %v749
      %vm833 = vcmp.eq.f32.partialorder %v832, 8.507059e+37
      %v834 = vand.u32 %v749, 2147483648
      %v835 = vor.u32 1.1754944e-38, %v834
      %v836 = vsel %vm833, %v835, %v831
      %v837 = vmul.f32 1.0, %v836
      %v838 = vrcp.pop %v750
      %v839 = vmul.f32 %v750, %v838
      %v840 = vsub.f32 1.0, %v839
      %v841 = vmul.f32 %v838, %v840
      %v842 = vadd.f32 %v838, %v841
      %vm843 = vweird.f32 %v750
      %vm844 = vweird.f32 %v838
      %vm845 = vmor %vm843, %vm844
      %v846 = vsel %vm845, %v838, %v842
      %v847 = vand.u32 2147483647, %v750
      %vm848 = vcmp.eq.f32.partialorder %v847, 8.507059e+37
      %v849 = vand.u32 %v750, 2147483648
      %v850 = vor.u32 1.1754944e-38, %v849
      %v851 = vsel %vm848, %v850, %v846
      %v852 = vmul.f32 1.0, %v851
      %v853 = vrcp.pop %v751
      %v854 = vmul.f32 %v751, %v853
      %v855 = vsub.f32 1.0, %v854
      %v856 = vmul.f32 %v853, %v855
      %v857 = vadd.f32 %v853, %v856
      %vm858 = vweird.f32 %v751
      %vm859 = vweird.f32 %v853
      %vm860 = vmor %vm858, %vm859
      %v861 = vsel %vm860, %v853, %v857
      %v862 = vand.u32 2147483647, %v751
      %vm863 = vcmp.eq.f32.partialorder %v862, 8.507059e+37
      %v864 = vand.u32 %v751, 2147483648
      %v865 = vor.u32 1.1754944e-38, %v864
      %v866 = vsel %vm863, %v865, %v861
      %v867 = vmul.f32 1.0, %v866
      %v868 = vrcp.pop %v752
      %v869 = vmul.f32 %v752, %v868
      %v870 = vsub.f32 1.0, %v869
      %v871 = vmul.f32 %v868, %v870
      %v872 = vadd.f32 %v868, %v871
      %vm873 = vweird.f32 %v752
      %vm874 = vweird.f32 %v868
      %vm875 = vmor %vm873, %vm874
      %v876 = vsel %vm875, %v868, %v872
      %v877 = vand.u32 2147483647, %v752
      %vm878 = vcmp.eq.f32.partialorder %v877, 8.507059e+37
      %v879 = vand.u32 %v752, 2147483648
      %v880 = vor.u32 1.1754944e-38, %v879
      %v881 = vsel %vm878, %v880, %v876
      %v882 = vmul.f32 1.0, %v881
      %v883 = vrcp.pop %v753
      %v884 = vmul.f32 %v753, %v883
      %v885 = vsub.f32 1.0, %v884
      %v886 = vmul.f32 %v883, %v885
      %v887 = vadd.f32 %v883, %v886
      %vm888 = vweird.f32 %v753
      %vm889 = vweird.f32 %v883
      %vm890 = vmor %vm888, %vm889
      %v891 = vsel %vm890, %v883, %v887
      %v892 = vand.u32 2147483647, %v753
      %vm893 = vcmp.eq.f32.partialorder %v892, 8.507059e+37
      %v894 = vand.u32 %v753, 2147483648
      %v895 = vor.u32 1.1754944e-38, %v894
      %v896 = vsel %vm893, %v895, %v891
      %v897 = vmul.f32 1.0, %v896
      %v898 = vrcp.pop %v754
      %v899 = vmul.f32 %v754, %v898
      %v900 = vsub.f32 1.0, %v899
      %v901 = vmul.f32 %v898, %v900
      %v902 = vadd.f32 %v898, %v901
      %vm903 = vweird.f32 %v754
      %vm904 = vweird.f32 %v898
      %vm905 = vmor %vm903, %vm904
      %v906 = vsel %vm905, %v898, %v902
      %v907 = vand.u32 2147483647, %v754
      %vm908 = vcmp.eq.f32.partialorder %v907, 8.507059e+37
      %v909 = vand.u32 %v754, 2147483648
      %v910 = vor.u32 1.1754944e-38, %v909
      %v911 = vsel %vm908, %v910, %v906
      %v912 = vmul.f32 1.0, %v911
      %v913 = vrcp.pop %v755
      %v914 = vmul.f32 %v755, %v913
      %v915 = vsub.f32 1.0, %v914
      %v916 = vmul.f32 %v913, %v915
      %v917 = vadd.f32 %v913, %v916
      %vm918 = vweird.f32 %v755
      %vm919 = vweird.f32 %v913
      %vm920 = vmor %vm918, %vm919
      %v921 = vsel %vm920, %v913, %v917
      %v922 = vand.u32 2147483647, %v755
      %vm923 = vcmp.eq.f32.partialorder %v922, 8.507059e+37
      %v924 = vand.u32 %v755, 2147483648
      %v925 = vor.u32 1.1754944e-38, %v924
      %v926 = vsel %vm923, %v925, %v921
      %v927 = vmul.f32 1.0, %v926
      %v928 = vrcp.pop %v756
      %v929 = vmul.f32 %v756, %v928
      %v930 = vsub.f32 1.0, %v929
      %v931 = vmul.f32 %v928, %v930
      %v932 = vadd.f32 %v928, %v931
      %vm933 = vweird.f32 %v756
      %vm934 = vweird.f32 %v928
      %vm935 = vmor %vm933, %vm934
      %v936 = vsel %vm935, %v928, %v932
      %v937 = vand.u32 2147483647, %v756
      %vm938 = vcmp.eq.f32.partialorder %v937, 8.507059e+37
      %v939 = vand.u32 %v756, 2147483648
      %v940 = vor.u32 1.1754944e-38, %v939
      %v941 = vsel %vm938, %v940, %v936
      %v942 = vmul.f32 1.0, %v941
      %v943 = vrcp.pop %v757
      %v944 = vmul.f32 %v757, %v943
      %v945 = vsub.f32 1.0, %v944
      %v946 = vmul.f32 %v943, %v945
      %v947 = vadd.f32 %v943, %v946
      %vm948 = vweird.f32 %v757
      %vm949 = vweird.f32 %v943
      %vm950 = vmor %vm948, %vm949
      %v951 = vsel %vm950, %v943, %v947
      %v952 = vand.u32 2147483647, %v757
      %vm953 = vcmp.eq.f32.partialorder %v952, 8.507059e+37
      %v954 = vand.u32 %v757, 2147483648
      %v955 = vor.u32 1.1754944e-38, %v954
      %v956 = vsel %vm953, %v955, %v951
      %v957 = vmul.f32 1.0, %v956
      %v958 = vrcp.pop %v758
      %v959 = vmul.f32 %v758, %v958
      %v960 = vsub.f32 1.0, %v959
      %v961 = vmul.f32 %v958, %v960
      %v962 = vadd.f32 %v958, %v961
      %vm963 = vweird.f32 %v758
      %vm964 = vweird.f32 %v958
      %vm965 = vmor %vm963, %vm964
      %v966 = vsel %vm965, %v958, %v962
      %v967 = vand.u32 2147483647, %v758
      %vm968 = vcmp.eq.f32.partialorder %v967, 8.507059e+37
      %v969 = vand.u32 %v758, 2147483648
      %v970 = vor.u32 1.1754944e-38, %v969
      %v971 = vsel %vm968, %v970, %v966
      %v972 = vmul.f32 1.0, %v971
      %v973 = vrcp.pop %v759
      %v974 = vmul.f32 %v759, %v973
      %v975 = vsub.f32 1.0, %v974
      %v976 = vmul.f32 %v973, %v975
      %v977 = vadd.f32 %v973, %v976
      %vm978 = vweird.f32 %v759
      %vm979 = vweird.f32 %v973
      %vm980 = vmor %vm978, %vm979
      %v981 = vsel %vm980, %v973, %v977
      %v982 = vand.u32 2147483647, %v759
      %vm983 = vcmp.eq.f32.partialorder %v982, 8.507059e+37
      %v984 = vand.u32 %v759, 2147483648
      %v985 = vor.u32 1.1754944e-38, %v984
      %v986 = vsel %vm983, %v985, %v981
      %v987 = vmul.f32 1.0, %v986
      %v988 = vrcp.pop %v760
      %v989 = vmul.f32 %v760, %v988
      %v990 = vsub.f32 1.0, %v989
      %v991 = vmul.f32 %v988, %v990
      %v992 = vadd.f32 %v988, %v991
      %vm993 = vweird.f32 %v760
      %vm994 = vweird.f32 %v988
      %vm995 = vmor %vm993, %vm994
      %v996 = vsel %vm995, %v988, %v992
      %v997 = vand.u32 2147483647, %v760
      %vm998 = vcmp.eq.f32.partialorder %v997, 8.507059e+37
      %v999 = vand.u32 %v760, 2147483648
      %v1000 = vor.u32 1.1754944e-38, %v999
      %v1001 = vsel %vm998, %v1000, %v996
      %v1002 = vmul.f32 1.0, %v1001
      %v1003 = vrcp.pop %v761
      %v1004 = vmul.f32 %v761, %v1003
      %v1005 = vsub.f32 1.0, %v1004
      %v1006 = vmul.f32 %v1003, %v1005
      %v1007 = vadd.f32 %v1003, %v1006
      %vm1008 = vweird.f32 %v761
      %vm1009 = vweird.f32 %v1003
      %vm1010 = vmor %vm1008, %vm1009
      %v1011 = vsel %vm1010, %v1003, %v1007
      %v1012 = vand.u32 2147483647, %v761
      %vm1013 = vcmp.eq.f32.partialorder %v1012, 8.507059e+37
      %v1014 = vand.u32 %v761, 2147483648
      %v1015 = vor.u32 1.1754944e-38, %v1014
      %v1016 = vsel %vm1013, %v1015, %v1011
      %v1017 = vmul.f32 1.0, %v1016
      %v1018 = vrcp.pop %v762
      %v1019 = vmul.f32 %v762, %v1018
      %v1020 = vsub.f32 1.0, %v1019
      %v1021 = vmul.f32 %v1018, %v1020
      %v1022 = vadd.f32 %v1018, %v1021
      %vm1023 = vweird.f32 %v762
      %vm1024 = vweird.f32 %v1018
      %vm1025 = vmor %vm1023, %vm1024
      %v1026 = vsel %vm1025, %v1018, %v1022
      %v1027 = vand.u32 2147483647, %v762
      %vm1028 = vcmp.eq.f32.partialorder %v1027, 8.507059e+37
      %v1029 = vand.u32 %v762, 2147483648
      %v1030 = vor.u32 1.1754944e-38, %v1029
      %v1031 = vsel %vm1028, %v1030, %v1026
      %v1032 = vmul.f32 1.0, %v1031
      %v1033 = vrcp.pop %v763
      %v1034 = vmul.f32 %v763, %v1033
      %v1035 = vsub.f32 1.0, %v1034
      %v1036 = vmul.f32 %v1033, %v1035
      %v1037 = vadd.f32 %v1033, %v1036
      %vm1038 = vweird.f32 %v763
      %vm1039 = vweird.f32 %v1033
      %vm1040 = vmor %vm1038, %vm1039
      %v1041 = vsel %vm1040, %v1033, %v1037
      %v1042 = vand.u32 2147483647, %v763
      %vm1043 = vcmp.eq.f32.partialorder %v1042, 8.507059e+37
      %v1044 = vand.u32 %v763, 2147483648
      %v1045 = vor.u32 1.1754944e-38, %v1044
      %v1046 = vsel %vm1043, %v1045, %v1041
      %v1047 = vmul.f32 1.0, %v1046
      %v1048 = vrcp.pop %v764
      %v1049 = vmul.f32 %v764, %v1048
      %v1050 = vsub.f32 1.0, %v1049
      %v1051 = vmul.f32 %v1048, %v1050
      %v1052 = vadd.f32 %v1048, %v1051
      %vm1053 = vweird.f32 %v764
      %vm1054 = vweird.f32 %v1048
      %vm1055 = vmor %vm1053, %vm1054
      %v1056 = vsel %vm1055, %v1048, %v1052
      %v1057 = vand.u32 2147483647, %v764
      %vm1058 = vcmp.eq.f32.partialorder %v1057, 8.507059e+37
      %v1059 = vand.u32 %v764, 2147483648
      %v1060 = vor.u32 1.1754944e-38, %v1059
      %v1061 = vsel %vm1058, %v1060, %v1056
      %v1062 = vmul.f32 1.0, %v1061
      %v1063 = vrcp.pop %v765
      %v1064 = vmul.f32 %v765, %v1063
      %v1065 = vsub.f32 1.0, %v1064
      %v1066 = vmul.f32 %v1063, %v1065
      %v1067 = vadd.f32 %v1063, %v1066
      %vm1068 = vweird.f32 %v765
      %vm1069 = vweird.f32 %v1063
      %vm1070 = vmor %vm1068, %vm1069
      %v1071 = vsel %vm1070, %v1063, %v1067
      %v1072 = vand.u32 2147483647, %v765
      %vm1073 = vcmp.eq.f32.partialorder %v1072, 8.507059e+37
      %v1074 = vand.u32 %v765, 2147483648
      %v1075 = vor.u32 1.1754944e-38, %v1074
      %v1076 = vsel %vm1073, %v1075, %v1071
      %v1077 = vmul.f32 1.0, %v1076
      %v1078 = vrcp.pop %v766
      %v1079 = vmul.f32 %v766, %v1078
      %v1080 = vsub.f32 1.0, %v1079
      %v1081 = vmul.f32 %v1078, %v1080
      %v1082 = vadd.f32 %v1078, %v1081
      %vm1083 = vweird.f32 %v766
      %vm1084 = vweird.f32 %v1078
      %vm1085 = vmor %vm1083, %vm1084
      %v1086 = vsel %vm1085, %v1078, %v1082
      %v1087 = vand.u32 2147483647, %v766
      %vm1088 = vcmp.eq.f32.partialorder %v1087, 8.507059e+37
      %v1089 = vand.u32 %v766, 2147483648
      %v1090 = vor.u32 1.1754944e-38, %v1089
      %v1091 = vsel %vm1088, %v1090, %v1086
      %v1092 = vmul.f32 1.0, %v1091
      %v1093 = vrcp.pop %v767
      %v1094 = vmul.f32 %v767, %v1093
      %v1095 = vsub.f32 1.0, %v1094
      %v1096 = vmul.f32 %v1093, %v1095
      %v1097 = vadd.f32 %v1093, %v1096
      %vm1098 = vweird.f32 %v767
      %vm1099 = vweird.f32 %v1093
      %vm1100 = vmor %vm1098, %vm1099
      %v1101 = vsel %vm1100, %v1093, %v1097
      %v1102 = vand.u32 2147483647, %v767
      %vm1103 = vcmp.eq.f32.partialorder %v1102, 8.507059e+37
      %v1104 = vand.u32 %v767, 2147483648
      %v1105 = vor.u32 1.1754944e-38, %v1104
      %v1106 = vsel %vm1103, %v1105, %v1101
      %v1107 = vmul.f32 1.0, %v1106
      %v1108 = vrcp.pop %v768
      %v1109 = vmul.f32 %v768, %v1108
      %v1110 = vsub.f32 1.0, %v1109
      %v1111 = vmul.f32 %v1108, %v1110
      %v1112 = vadd.f32 %v1108, %v1111
      %vm1113 = vweird.f32 %v768
      %vm1114 = vweird.f32 %v1108
      %vm1115 = vmor %vm1113, %vm1114
      %v1116 = vsel %vm1115, %v1108, %v1112
      %v1117 = vand.u32 2147483647, %v768
      %vm1118 = vcmp.eq.f32.partialorder %v1117, 8.507059e+37
      %v1119 = vand.u32 %v768, 2147483648
      %v1120 = vor.u32 1.1754944e-38, %v1119
      %v1121 = vsel %vm1118, %v1120, %v1116
      %v1122 = vmul.f32 1.0, %v1121
      %v1123 = vrcp.pop %v769
      %v1124 = vmul.f32 %v769, %v1123
      %v1125 = vsub.f32 1.0, %v1124
      %v1126 = vmul.f32 %v1123, %v1125
      %v1127 = vadd.f32 %v1123, %v1126
      %vm1128 = vweird.f32 %v769
      %vm1129 = vweird.f32 %v1123
      %vm1130 = vmor %vm1128, %vm1129
      %v1131 = vsel %vm1130, %v1123, %v1127
      %v1132 = vand.u32 2147483647, %v769
      %vm1133 = vcmp.eq.f32.partialorder %v1132, 8.507059e+37
      %v1134 = vand.u32 %v769, 2147483648
      %v1135 = vor.u32 1.1754944e-38, %v1134
      %v1136 = vsel %vm1133, %v1135, %v1131
      %v1137 = vmul.f32 1.0, %v1136
      %v1138 = vrcp.pop %v770
      %v1139 = vmul.f32 %v770, %v1138
      %v1140 = vsub.f32 1.0, %v1139
      %v1141 = vmul.f32 %v1138, %v1140
      %v1142 = vadd.f32 %v1138, %v1141
      %vm1143 = vweird.f32 %v770
      %vm1144 = vweird.f32 %v1138
      %vm1145 = vmor %vm1143, %vm1144
      %v1146 = vsel %vm1145, %v1138, %v1142
      %v1147 = vand.u32 2147483647, %v770
      %vm1148 = vcmp.eq.f32.partialorder %v1147, 8.507059e+37
      %v1149 = vand.u32 %v770, 2147483648
      %v1150 = vor.u32 1.1754944e-38, %v1149
      %v1151 = vsel %vm1148, %v1150, %v1146
      %v1152 = vmul.f32 1.0, %v1151
      %v1153 = vrcp.pop %v771
      %v1154 = vmul.f32 %v771, %v1153
      %v1155 = vsub.f32 1.0, %v1154
      %v1156 = vmul.f32 %v1153, %v1155
      %v1157 = vadd.f32 %v1153, %v1156
      %vm1158 = vweird.f32 %v771
      %vm1159 = vweird.f32 %v1153
      %vm1160 = vmor %vm1158, %vm1159
      %v1161 = vsel %vm1160, %v1153, %v1157
      %v1162 = vand.u32 2147483647, %v771
      %vm1163 = vcmp.eq.f32.partialorder %v1162, 8.507059e+37
      %v1164 = vand.u32 %v771, 2147483648
      %v1165 = vor.u32 1.1754944e-38, %v1164
      %v1166 = vsel %vm1163, %v1165, %v1161
      %v1167 = vmul.f32 1.0, %v1166
      %v1168 = vrcp.pop %v772
      %v1169 = vmul.f32 %v772, %v1168
      %v1170 = vsub.f32 1.0, %v1169
      %v1171 = vmul.f32 %v1168, %v1170
      %v1172 = vadd.f32 %v1168, %v1171
      %vm1173 = vweird.f32 %v772
      %vm1174 = vweird.f32 %v1168
      %vm1175 = vmor %vm1173, %vm1174
      %v1176 = vsel %vm1175, %v1168, %v1172
      %v1177 = vand.u32 2147483647, %v772
      %vm1178 = vcmp.eq.f32.partialorder %v1177, 8.507059e+37
      %v1179 = vand.u32 %v772, 2147483648
      %v1180 = vor.u32 1.1754944e-38, %v1179
      %v1181 = vsel %vm1178, %v1180, %v1176
      %v1182 = vmul.f32 1.0, %v1181
      %v1183 = vrcp.pop %v773
      %v1184 = vmul.f32 %v773, %v1183
      %v1185 = vsub.f32 1.0, %v1184
      %v1186 = vmul.f32 %v1183, %v1185
      %v1187 = vadd.f32 %v1183, %v1186
      %vm1188 = vweird.f32 %v773
      %vm1189 = vweird.f32 %v1183
      %vm1190 = vmor %vm1188, %vm1189
      %v1191 = vsel %vm1190, %v1183, %v1187
      %v1192 = vand.u32 2147483647, %v773
      %vm1193 = vcmp.eq.f32.partialorder %v1192, 8.507059e+37
      %v1194 = vand.u32 %v773, 2147483648
      %v1195 = vor.u32 1.1754944e-38, %v1194
      %v1196 = vsel %vm1193, %v1195, %v1191
      %v1197 = vmul.f32 1.0, %v1196
      %v1198 = vrcp.pop %v774
      %v1199 = vmul.f32 %v774, %v1198
      %v1200 = vsub.f32 1.0, %v1199
      %v1201 = vmul.f32 %v1198, %v1200
      %v1202 = vadd.f32 %v1198, %v1201
      %vm1203 = vweird.f32 %v774
      %vm1204 = vweird.f32 %v1198
      %vm1205 = vmor %vm1203, %vm1204
      %v1206 = vsel %vm1205, %v1198, %v1202
      %v1207 = vand.u32 2147483647, %v774
      %vm1208 = vcmp.eq.f32.partialorder %v1207, 8.507059e+37
      %v1209 = vand.u32 %v774, 2147483648
      %v1210 = vor.u32 1.1754944e-38, %v1209
      %v1211 = vsel %vm1208, %v1210, %v1206
      %v1212 = vmul.f32 1.0, %v1211
      %v1213 = vrcp.pop %v775
      %v1214 = vmul.f32 %v775, %v1213
      %v1215 = vsub.f32 1.0, %v1214
      %v1216 = vmul.f32 %v1213, %v1215
      %v1217 = vadd.f32 %v1213, %v1216
      %vm1218 = vweird.f32 %v775
      %vm1219 = vweird.f32 %v1213
      %vm1220 = vmor %vm1218, %vm1219
      %v1221 = vsel %vm1220, %v1213, %v1217
      %v1222 = vand.u32 2147483647, %v775
      %vm1223 = vcmp.eq.f32.partialorder %v1222, 8.507059e+37
      %v1224 = vand.u32 %v775, 2147483648
      %v1225 = vor.u32 1.1754944e-38, %v1224
      %v1226 = vsel %vm1223, %v1225, %v1221
      %v1227 = vmul.f32 1.0, %v1226
      %v1228 = vrcp.pop %v776
      %v1229 = vmul.f32 %v776, %v1228
      %v1230 = vsub.f32 1.0, %v1229
      %v1231 = vmul.f32 %v1228, %v1230
      %v1232 = vadd.f32 %v1228, %v1231
      %vm1233 = vweird.f32 %v776
      %vm1234 = vweird.f32 %v1228
      %vm1235 = vmor %vm1233, %vm1234
      %v1236 = vsel %vm1235, %v1228, %v1232
      %v1237 = vand.u32 2147483647, %v776
      %vm1238 = vcmp.eq.f32.partialorder %v1237, 8.507059e+37
      %v1239 = vand.u32 %v776, 2147483648
      %v1240 = vor.u32 1.1754944e-38, %v1239
      %v1241 = vsel %vm1238, %v1240, %v1236
      %v1242 = vmul.f32 1.0, %v1241
      %v1243 = vrcp.pop %v777
      %v1244 = vmul.f32 %v777, %v1243
      %v1245 = vsub.f32 1.0, %v1244
      %v1246 = vmul.f32 %v1243, %v1245
      %v1247 = vadd.f32 %v1243, %v1246
      %vm1248 = vweird.f32 %v777
      %vm1249 = vweird.f32 %v1243
      %vm1250 = vmor %vm1248, %vm1249
      %v1251 = vsel %vm1250, %v1243, %v1247
      %v1252 = vand.u32 2147483647, %v777
      %vm1253 = vcmp.eq.f32.partialorder %v1252, 8.507059e+37
      %v1254 = vand.u32 %v777, 2147483648
      %v1255 = vor.u32 1.1754944e-38, %v1254
      %v1256 = vsel %vm1253, %v1255, %v1251
      %v1257 = vmul.f32 1.0, %v1256
      %v1258 = vmul.f32 %v618, %v792
      %v1259 = vmul.f32 %v619, %v807
      %v1260 = vmul.f32 %v620, %v822
      %v1261 = vmul.f32 %v621, %v837
      %v1262 = vmul.f32 %v622, %v852
      %v1263 = vmul.f32 %v623, %v867
      %v1264 = vmul.f32 %v624, %v882
      %v1265 = vmul.f32 %v625, %v897
      %v1266 = vmul.f32 %v626, %v912
      %v1267 = vmul.f32 %v627, %v927
      %v1268 = vmul.f32 %v628, %v942
      %v1269 = vmul.f32 %v629, %v957
      %v1270 = vmul.f32 %v630, %v972
      %v1271 = vmul.f32 %v631, %v987
      %v1272 = vmul.f32 %v632, %v1002
      %v1273 = vmul.f32 %v633, %v1017
      %v1274 = vmul.f32 %v634, %v1032
      %v1275 = vmul.f32 %v635, %v1047
      %v1276 = vmul.f32 %v636, %v1062
      %v1277 = vmul.f32 %v637, %v1077
      %v1278 = vmul.f32 %v638, %v1092
      %v1279 = vmul.f32 %v639, %v1107
      %v1280 = vmul.f32 %v640, %v1122
      %v1281 = vmul.f32 %v641, %v1137
      %v1282 = vmul.f32 %v642, %v1152
      %v1283 = vmul.f32 %v643, %v1167
      %v1284 = vmul.f32 %v644, %v1182
      %v1285 = vmul.f32 %v645, %v1197
      %v1286 = vmul.f32 %v646, %v1212
      %v1287 = vmul.f32 %v647, %v1227
      %v1288 = vmul.f32 %v648, %v1242
      %v1289 = vmul.f32 %v649, %v1257
      %1290 = vst [vmem:[%s295] sm:$0xff] %v1258
      %1291 = vst [vmem:[%s295 + $0x8] sm:$0xff] %v1259
      %1292 = vst [vmem:[%s295 + $0x10] sm:$0xff] %v1260
      %1293 = vst [vmem:[%s295 + $0x18] sm:$0xff] %v1261
      %1294 = vst [vmem:[%s295 + $0x20] sm:$0xff] %v1262
      %1295 = vst [vmem:[%s295 + $0x28] sm:$0xff] %v1263
      %1296 = vst [vmem:[%s295 + $0x30] sm:$0xff] %v1264
      %1297 = vst [vmem:[%s295 + $0x38] sm:$0xff] %v1265
      %1298 = vst [vmem:[%s295 + $0x40] sm:$0xff] %v1266
      %1299 = vst [vmem:[%s295 + $0x48] sm:$0xff] %v1267
      %1300 = vst [vmem:[%s295 + $0x50] sm:$0xff] %v1268
      %1301 = vst [vmem:[%s295 + $0x58] sm:$0xff] %v1269
      %1302 = vst [vmem:[%s295 + $0x60] sm:$0xff] %v1270
      %1303 = vst [vmem:[%s295 + $0x68] sm:$0xff] %v1271
      %1304 = vst [vmem:[%s295 + $0x70] sm:$0xff] %v1272
      %1305 = vst [vmem:[%s295 + $0x78] sm:$0xff] %v1273
      %1306 = vst [vmem:[%s295 + $0x80] sm:$0xff] %v1274
      %1307 = vst [vmem:[%s295 + $0x88] sm:$0xff] %v1275
      %1308 = vst [vmem:[%s295 + $0x90] sm:$0xff] %v1276
      %1309 = vst [vmem:[%s295 + $0x98] sm:$0xff] %v1277
      %1310 = vst [vmem:[%s295 + $0xa0] sm:$0xff] %v1278
      %1311 = vst [vmem:[%s295 + $0xa8] sm:$0xff] %v1279
      %1312 = vst [vmem:[%s295 + $0xb0] sm:$0xff] %v1280
      %1313 = vst [vmem:[%s295 + $0xb8] sm:$0xff] %v1281
      %1314 = vst [vmem:[%s295 + $0xc0] sm:$0xff] %v1282
      %1315 = vst [vmem:[%s295 + $0xc8] sm:$0xff] %v1283
      %1316 = vst [vmem:[%s295 + $0xd0] sm:$0xff] %v1284
      %1317 = vst [vmem:[%s295 + $0xd8] sm:$0xff] %v1285
      %1318 = vst [vmem:[%s295 + $0xe0] sm:$0xff] %v1286
      %1319 = vst [vmem:[%s295 + $0xe8] sm:$0xff] %v1287
      %1320 = vst [vmem:[%s295 + $0xf0] sm:$0xff] %v1288
      %1321 = vst [vmem:[%s295 + $0xf8] sm:$0xff] %v1289
      %s1322 = smul.u32 32, %s22
      %p1323 = scmp.lt.s32.totalorder %s20, 1
      %s1324 = scalar_select %p1323, %s20, 1
      %p1325 = scmp.lt.s32.totalorder %s1322, 31
      %s1326 = scalar_select %p1325, %s1322, 31
      %p1327 = scmp.lt.s32.totalorder %s21, 0
      %s1328 = scalar_select %p1327, %s21, 0
      %s1329 = sadd.s32 %s1328, %s1326
      %s1330 = smul.addr %s1324, 32
      %s1331 = sadd.s32 %s1329, %s1330
      %s1332 = smul.addr %s1331, 8
      %s1333 = scalar_lea.vmem %s4, %s1332
      // Predicated region
      $region37: #{conv_bn_silu.1} parent=35 // pred_check
        %p1334 = pneg %p162
      $region38: #{conv_bn_silu.1} parent=35 // pred_check_branch
        %1336 = sbr.rel (%p1334) target = $region40
      $region39: #{conv_bn_silu.1} parent=35 // pred_region
        %s1337 = smul.u32 32, %s22
      $region40: #{conv_bn_silu.1} parent=35 // pred_fallthru
        _
    $region36: #{conv_bn_silu.1} parent=5 // pred_fallthru
      _
    %p1338 = scmp.le.s32.totalorder 2, %s10
    // Predicated region
    $region41: #{conv_bn_silu.1} parent=5 // pred_check
      %p1339 = pneg %p1338
    $region42: #{conv_bn_silu.1} parent=5 // pred_check_branch
      %1341 = sbr.rel (%p1339) target = $region44
    $region43: #{conv_bn_silu.1} parent=5 // pred_region
      %s1342 = ssub.s32 %s10, 2
      // Predicated region
      $region45: #{conv_bn_silu.1} parent=43 // pred_check
        %p1343 = pneg %p168
      $region46: #{conv_bn_silu.1} parent=43 // pred_check_branch
        %1345 = sbr.rel (%p1343) target = $region48
      $region47: #{conv_bn_silu.1} parent=43 // pred_region
        %s1346 = smul.u32 32, %s25
        %p1347 = scmp.lt.s32.totalorder %s23, 1
        %s1348 = scalar_select %p1347, %s23, 1
        %p1349 = scmp.lt.s32.totalorder %s1346, 31
        %s1350 = scalar_select %p1349, %s1346, 31
        %p1351 = scmp.lt.s32.totalorder %s24, 0
        %s1352 = scalar_select %p1351, %s24, 0
        %s1353 = sadd.s32 %s1352, %s1350
        %s1354 = smul.addr %s1348, 32
        %s1355 = sadd.s32 %s1353, %s1354
        %s1356 = smul.addr %s1355, 8
        %s1357 = scalar_lea.vmem %s4, %s1356
      $region48: #{conv_bn_silu.1} parent=43 // pred_fallthru
        _
    $region44: #{conv_bn_silu.1} parent=5 // pred_fallthru
      _
  $region6: #{conv_bn_silu.1} parent=0 // loop_footer
    %s14 = sadd.s32 1, %s10
  $region7: #{conv_bn_silu.1} parent=0 // loop_footer_branch
    %9 = sbr.rel target = $region3
  $region8: #{conv_bn_silu.1} parent=0 // loop_exit
    _

</llo_original>
